<compile_context>
chip_gen: v5e
topology: v5e:2x2
jax: 0.10.0
libtpu: 0.0.40
codegen_flags: <defaults>
</compile_context>

<pallas_src>
import functools

import numpy as np

import jax
import jax.numpy as jnp
from jax.experimental import pallas as pl
from jax.experimental.pallas import tpu as pltpu


def _sepconv_kernel(x_ref, mw_ref, m_ref, bp_ref, o_ref, *,
                    shifts, sp, c_in, n_total, nb, ragged):
    """One batch-block per grid step.

    x_ref  : (nb*C_in, Sp)         input rows = (batch, channel), lanes = H*W (padded)
    mw_ref : (KH*KW, nb*C_in, Sp)  per-tap (boundary mask x depthwise weight) constants
    m_ref  : (nb*C_out, nb*C_in)   block-diagonal kron(I_nb, W_pw) pointwise matrix
    bp_ref : (nb*C_out, 1)         pointwise bias with depthwise bias folded in
    o_ref  : (nb*C_out, Sp)        output rows = (batch, out-channel)
    """
    x = x_ref[...].astype(jnp.float32)

    if ragged:
        # Final block may extend past batch N: zero the stale rows so they can
        # never inject NaN/Inf into the MXU reduction below.
        row = jax.lax.broadcasted_iota(jnp.int32, x.shape, 0)
        valid = jnp.minimum(nb, n_total - pl.program_id(0) * nb) * c_in
        x = jnp.where(row < valid, x, 0.0)

    # ---- depthwise conv: lane rolls (XLU) x folded mask*weight constants (VPU)
    acc = None
    for t, sh in enumerate(shifts):
        shift = (-sh) % sp
        shifted = x if shift == 0 else pltpu.roll(x, shift=shift, axis=1)
        term = shifted * mw_ref[t]
        acc = term if acc is None else acc + term

    # ---- 1x1 pointwise conv as one MXU matmul (block-diagonal weight matrix).
    # Split both operands into bf16 hi/lo parts so the result is f32-exact even
    # if the backend's default f32 matmul contraction truncates to bf16.
    m = m_ref[...]
    mh = m.astype(jnp.bfloat16).astype(jnp.float32)
    ml = m - mh
    ah = acc.astype(jnp.bfloat16).astype(jnp.float32)
    al = acc - ah
    y = jnp.dot(mh, ah, preferred_element_type=jnp.float32)
    y = y + jnp.dot(mh, al, preferred_element_type=jnp.float32)
    y = y + jnp.dot(ml, ah, preferred_element_type=jnp.float32)

    o_ref[...] = (y + bp_ref[...]).astype(o_ref.dtype)


def _tpu_generation():
    try:
        kind = jax.devices()[0].device_kind.lower()
    except Exception:
        return "unknown"
    if "v5 lite" in kind or "v5e" in kind or "v5lite" in kind:
        return "v5e"
    if "v6" in kind:
        return "v6e"
    if "v7" in kind or "7x" in kind:
        return "v7x"
    return "unknown"


def separable_conv2d(x_nchw, w_dw, b_dw, w_pw, b_pw, kernel_size, padding,
                     *, max_batch_block=None):
    """Forward pass matching torch SeparableConv2d.

    x_nchw : (N, C_in, H, W)
    w_dw   : (C_in, 1, KH, KW)   depthwise_conv.weight (groups=C_in)
    b_dw   : (C_in,)             depthwise_conv.bias
    w_pw   : (C_out, C_in, 1, 1) conv2d_1x1.weight
    b_pw   : (C_out,)            conv2d_1x1.bias
    returns (N, C_out, H_out, W_out)
    """
    N, C_in, H, W = map(int, x_nchw.shape)
    KH, KW = kernel_size
    ph, pw_ = padding
    C_out = int(w_pw.shape[0])
    K = KH * KW
    H_out = H + 2 * ph - KH + 1
    W_out = W + 2 * pw_ - KW + 1

    # Compute grid covers both input and output spatial extents; lane dim is
    # padded to a multiple of 128 so every block is lane-dense.
    Hc, Wc = max(H, H_out), max(W, W_out)
    S = Hc * Wc
    Sp = ((S + 127) // 128) * 128

    x = x_nchw
    if (Hc, Wc) != (H, W):
        # Rare case (padding > (k-1)/2): grow spatial extent with zeros.
        x = jnp.pad(x, ((0, 0), (0, 0), (0, Hc - H), (0, Wc - W)))
    x_flat = x.reshape(N * C_in, S)            # contiguous reshape, no data movement
    if Sp != S:
        x_flat = jnp.pad(x_flat, ((0, 0), (0, Sp - S)))

    # Static per-tap boundary masks (trace-time numpy) and flat-index shifts.
    rr, cc = np.meshgrid(np.arange(Hc), np.arange(Wc), indexing="ij")
    masks, shifts = [], []
    for kh in range(KH):
        for kw in range(KW):
            dr, dc = kh - ph, kw - pw_
            m = ((rr + dr >= 0) & (rr + dr < H) & (cc + dc >= 0) & (cc + dc < W))
            masks.append(np.pad(m.astype(np.float32).reshape(S), (0, Sp - S)))
            shifts.append(dr * Wc + dc)
    mask_np = np.stack(masks)                   # (K, Sp)

    # ---- generation-aware batch-block selection -----------------------------
    gen = _tpu_generation()
    if gen == "v7x":                 # 64 MiB VMEM, 2 TensorCores: smaller budget, >=4 steps
        budget, vmem_cap, desired_steps = 20 << 20, 48 << 20, 4
    elif gen in ("v5e", "v6e"):      # single TensorCore: fattest block wins
        budget, vmem_cap, desired_steps = 24 << 20, 100 << 20, 1
    else:                            # v4/v5p/unknown: 2 cores, ample VMEM
        budget, vmem_cap, desired_steps = 20 << 20, 64 << 20, 2
    default_scoped = 16 << 20 if gen == "v5e" else 32 << 20
    itemsize = x_nchw.dtype.itemsize

    def vmem_est(nb):
        # Double-buffered DMA operands + f32 temporaries the body materializes.
        in_blk = nb * C_in * Sp * itemsize
        out_blk = nb * C_out * Sp * itemsize
        mw_blk = K * nb * C_in * Sp * 4
        mat_blk = (nb * C_out) * (nb * C_in) * 4
        temps = nb * Sp * 4 * (3 * C_in + 2 * C_out)
        return 2 * (in_blk + out_blk + mw_blk + mat_blk + 4096) + temps

    def layout_ok(nb):
        # (8,128) rule: sublane dim must be a multiple of 8 or the full dim.
        return nb == N or ((nb * C_in) % 8 == 0 and (nb * C_out) % 8 == 0)

    nb_cap = N if desired_steps <= 1 else max(1, N // desired_steps)
    if max_batch_block is not None:
        nb_cap = max(1, min(nb_cap, int(max_batch_block)))
    nb = next((c for c in range(nb_cap, 0, -1)
               if layout_ok(c) and vmem_est(c) <= budget), None)
    if nb is None:   # nothing fits the budget: smallest legal block, raise the limit
        nb = next(c for c in range(1, N + 1) if layout_ok(c))
    grid = (pl.cdiv(N, nb),)
    ragged = (N % nb) != 0

    vmem_limit = None
    need = vmem_est(nb)
    if need > (default_scoped * 3) // 5:
        vmem_limit = int(min(vmem_cap, max(default_scoped, need + need // 3)))

    # ---- fold parameters into trace-time constants ---------------------------
    f32 = jnp.float32
    w_taps = jnp.transpose(jnp.reshape(w_dw.astype(f32), (C_in, K)))      # (K, C_in)
    mw = jnp.tile(w_taps[:, :, None] * jnp.asarray(mask_np)[:, None, :],
                  (1, nb, 1))                                             # (K, nb*C_in, Sp)
    wp = jnp.reshape(w_pw.astype(f32), (C_out, C_in))
    bp_eff = b_pw.astype(f32) + jnp.dot(wp, b_dw.astype(f32),
                                        precision=jax.lax.Precision.HIGHEST)
    mat = jnp.kron(jnp.eye(nb, dtype=f32), wp)                            # block-diagonal
    bp_col = jnp.tile(bp_eff, nb).reshape(nb * C_out, 1)

    kernel = functools.partial(
        _sepconv_kernel, shifts=tuple(int(s) for s in shifts), sp=Sp,
        c_in=C_in, n_total=N, nb=nb, ragged=ragged)

    out_flat = pl.pallas_call(
        kernel,
        out_shape=jax.ShapeDtypeStruct((N * C_out, Sp), x_nchw.dtype),
        grid_spec=pltpu.PrefetchScalarGridSpec(
            num_scalar_prefetch=0,
            grid=grid,
            in_specs=[
                pl.BlockSpec((nb * C_in, Sp), lambda i: (i, 0)),
                pl.BlockSpec((K, nb * C_in, Sp), lambda i: (0, 0, 0)),
                pl.BlockSpec((nb * C_out, nb * C_in), lambda i: (0, 0)),
                pl.BlockSpec((nb * C_out, 1), lambda i: (0, 0)),
            ],
            out_specs=pl.BlockSpec((nb * C_out, Sp), lambda i: (i, 0)),
        ),
        compiler_params=pltpu.CompilerParams(
            dimension_semantics=("parallel",),
            vmem_limit_bytes=vmem_limit),
    )(x_flat, mw, mat, bp_col)

    out = out_flat[:, :S].reshape(N, C_out, Hc, Wc)
    if (Hc, Wc) != (H_out, W_out):
        out = out[:, :, :H_out, :W_out]
    return out


def _reference_np(x, w_dw, b_dw, w_pw, b_pw, padding):
    """Exact float64 numpy reference (PyTorch Conv2d semantics)."""
    x = np.asarray(x, np.float64)
    w_dw = np.asarray(w_dw, np.float64)
    b_dw = np.asarray(b_dw, np.float64)
    w_pw = np.asarray(w_pw, np.float64)
    b_pw = np.asarray(b_pw, np.float64)
    N, C, H, W = x.shape
    KH, KW = w_dw.shape[2], w_dw.shape[3]
    ph, pw_ = padding
    Ho, Wo = H + 2 * ph - KH + 1, W + 2 * pw_ - KW + 1
    xp = np.pad(x, ((0, 0), (0, 0), (ph, ph), (pw_, pw_)))
    y = np.zeros((N, C, Ho, Wo))
    for kh in range(KH):
        for kw in range(KW):
            y += xp[:, :, kh:kh + Ho, kw:kw + Wo] * w_dw[None, :, 0, kh, kw][..., None, None]
    y += b_dw[None, :, None, None]
    z = np.einsum('oc,nchw->nohw', w_pw[:, :, 0, 0], y) + b_pw[None, :, None, None]
    return z


if __name__ == "__main__":
    key = jax.random.PRNGKey(0)

    def make_params(k, c_in, c_out, ks):
        k1, k2, k3, k4 = jax.random.split(k, 4)
        w_dw = jax.random.normal(k1, (c_in, 1, *ks), dtype=jnp.float32) * 0.1
        b_dw = jax.random.normal(k2, (c_in,), dtype=jnp.float32) * 0.1
        w_pw = jax.random.normal(k3, (c_out, c_in, 1, 1), dtype=jnp.float32) * 0.1
        b_pw = jax.random.normal(k4, (c_out,), dtype=jnp.float32) * 0.1
        return w_dw, b_dw, w_pw, b_pw

    # Primary config (matches the module defaults) plus regression configs the
    # review asked for: no padding, H != W / ragged lane count, padding > (k-1)/2,
    # and a ragged batch grid (N % nb != 0).
    configs = [
        (2, 4, 8, 16, 16, (3, 3), (1, 1), None),
        (2, 4, 8, 16, 16, (3, 3), (0, 0), None),
        (2, 4, 8, 12, 10, (3, 3), (1, 1), None),
        (2, 4, 8,  8,  8, (3, 3), (2, 2), None),
        (5, 8, 8,  8,  8, (3, 3), (1, 1), 2),
    ]

    for idx, (N, C_in, C_out, H, W, ks, pad, mbb) in enumerate(configs):
        kk, kx = jax.random.split(jax.random.fold_in(key, idx))
        x = jax.random.normal(kx, (N, C_in, H, W), dtype=jnp.float32)
        w_dw, b_dw, w_pw, b_pw = make_params(kk, C_in, C_out, ks)

        out = separable_conv2d(x, w_dw, b_dw, w_pw, b_pw, ks, pad,
                               max_batch_block=mbb)
        out = jax.block_until_ready(out)

        ref = _reference_np(x, w_dw, b_dw, w_pw, b_pw, pad)
        assert out.shape == ref.shape, (idx, out.shape, ref.shape)
        np.testing.assert_allclose(np.asarray(out), ref, atol=1e-4, rtol=1e-4)

    print("KERNEL_OK")
</pallas_src>

<mosaic_0001>
module attributes {stable_mosaic.version = 11 : i64} {
  func.func @_sepconv_kernel(%arg0: i32, %arg1: memref<8x256xf32, #tpu.memory_space<vmem>>, %arg2: memref<9x8x256xf32, #tpu.memory_space<vmem>>, %arg3: memref<16x8xf32, #tpu.memory_space<vmem>>, %arg4: memref<16x1xf32, #tpu.memory_space<vmem>>, %arg5: memref<16x256xf32, #tpu.memory_space<vmem>>) attributes {dimension_semantics = [#tpu.dimension_semantics<parallel>], iteration_bounds = array<i64: 1>, scalar_prefetch = 0 : i64, scratch_operands = 0 : i64, tpu.core_type = #tpu.core_type<tc>, window_params = [{transform_indices = @transform_0, window_bounds = array<i64: 8, 256>}, {pipeline_mode = #tpu.pipeline_mode<synchronous>, transform_indices = @transform_1, window_bounds = array<i64: 9, 8, 256>}, {pipeline_mode = #tpu.pipeline_mode<synchronous>, transform_indices = @transform_2, window_bounds = array<i64: 16, 8>}, {pipeline_mode = #tpu.pipeline_mode<synchronous>, transform_indices = @transform_3, window_bounds = array<i64: 16, 1>}, {transform_indices = @transform_4, window_bounds = array<i64: 16, 256>}]} {
    %c0 = arith.constant 0 : index
    %c0_0 = arith.constant 0 : index
    %0 = vector.load %arg1[%c0, %c0_0] : memref<8x256xf32, #tpu.memory_space<vmem>>, vector<8x256xf32>
    %c17_i32 = arith.constant 17 : i32
    %1 = tpu.dynamic_rotate %0 by %c17_i32 dim 1 : vector<8x256xf32>, i32 -> vector<8x256xf32>
    %c0_1 = arith.constant 0 : index
    %c0_2 = arith.constant 0 : index
    %c0_3 = arith.constant 0 : index
    %2 = vector.load %arg2[%c0_1, %c0_2, %c0_3] : memref<9x8x256xf32, #tpu.memory_space<vmem>>, vector<1x8x256xf32>
    %3 = vector.shape_cast %2 : vector<1x8x256xf32> to vector<8x256xf32>
    %4 = arith.mulf %1, %3 : vector<8x256xf32>
    %c16_i32 = arith.constant 16 : i32
    %5 = tpu.dynamic_rotate %0 by %c16_i32 dim 1 : vector<8x256xf32>, i32 -> vector<8x256xf32>
    %c1 = arith.constant 1 : index
    %c0_4 = arith.constant 0 : index
    %c0_5 = arith.constant 0 : index
    %6 = vector.load %arg2[%c1, %c0_4, %c0_5] : memref<9x8x256xf32, #tpu.memory_space<vmem>>, vector<1x8x256xf32>
    %7 = vector.shape_cast %6 : vector<1x8x256xf32> to vector<8x256xf32>
    %8 = arith.mulf %5, %7 : vector<8x256xf32>
    %9 = arith.addf %4, %8 : vector<8x256xf32>
    %c15_i32 = arith.constant 15 : i32
    %10 = tpu.dynamic_rotate %0 by %c15_i32 dim 1 : vector<8x256xf32>, i32 -> vector<8x256xf32>
    %c2 = arith.constant 2 : index
    %c0_6 = arith.constant 0 : index
    %c0_7 = arith.constant 0 : index
    %11 = vector.load %arg2[%c2, %c0_6, %c0_7] : memref<9x8x256xf32, #tpu.memory_space<vmem>>, vector<1x8x256xf32>
    %12 = vector.shape_cast %11 : vector<1x8x256xf32> to vector<8x256xf32>
    %13 = arith.mulf %10, %12 : vector<8x256xf32>
    %14 = arith.addf %9, %13 : vector<8x256xf32>
    %c1_i32 = arith.constant 1 : i32
    %15 = tpu.dynamic_rotate %0 by %c1_i32 dim 1 : vector<8x256xf32>, i32 -> vector<8x256xf32>
    %c3 = arith.constant 3 : index
    %c0_8 = arith.constant 0 : index
    %c0_9 = arith.constant 0 : index
    %16 = vector.load %arg2[%c3, %c0_8, %c0_9] : memref<9x8x256xf32, #tpu.memory_space<vmem>>, vector<1x8x256xf32>
    %17 = vector.shape_cast %16 : vector<1x8x256xf32> to vector<8x256xf32>
    %18 = arith.mulf %15, %17 : vector<8x256xf32>
    %19 = arith.addf %14, %18 : vector<8x256xf32>
    %c4 = arith.constant 4 : index
    %c0_10 = arith.constant 0 : index
    %c0_11 = arith.constant 0 : index
    %20 = vector.load %arg2[%c4, %c0_10, %c0_11] : memref<9x8x256xf32, #tpu.memory_space<vmem>>, vector<1x8x256xf32>
    %21 = vector.shape_cast %20 : vector<1x8x256xf32> to vector<8x256xf32>
    %22 = arith.mulf %0, %21 : vector<8x256xf32>
    %23 = arith.addf %19, %22 : vector<8x256xf32>
    %c255_i32 = arith.constant 255 : i32
    %24 = tpu.dynamic_rotate %0 by %c255_i32 dim 1 : vector<8x256xf32>, i32 -> vector<8x256xf32>
    %c5 = arith.constant 5 : index
    %c0_12 = arith.constant 0 : index
    %c0_13 = arith.constant 0 : index
    %25 = vector.load %arg2[%c5, %c0_12, %c0_13] : memref<9x8x256xf32, #tpu.memory_space<vmem>>, vector<1x8x256xf32>
    %26 = vector.shape_cast %25 : vector<1x8x256xf32> to vector<8x256xf32>
    %27 = arith.mulf %24, %26 : vector<8x256xf32>
    %28 = arith.addf %23, %27 : vector<8x256xf32>
    %c241_i32 = arith.constant 241 : i32
    %29 = tpu.dynamic_rotate %0 by %c241_i32 dim 1 : vector<8x256xf32>, i32 -> vector<8x256xf32>
    %c6 = arith.constant 6 : index
    %c0_14 = arith.constant 0 : index
    %c0_15 = arith.constant 0 : index
    %30 = vector.load %arg2[%c6, %c0_14, %c0_15] : memref<9x8x256xf32, #tpu.memory_space<vmem>>, vector<1x8x256xf32>
    %31 = vector.shape_cast %30 : vector<1x8x256xf32> to vector<8x256xf32>
    %32 = arith.mulf %29, %31 : vector<8x256xf32>
    %33 = arith.addf %28, %32 : vector<8x256xf32>
    %c240_i32 = arith.constant 240 : i32
    %34 = tpu.dynamic_rotate %0 by %c240_i32 dim 1 : vector<8x256xf32>, i32 -> vector<8x256xf32>
    %c7 = arith.constant 7 : index
    %c0_16 = arith.constant 0 : index
    %c0_17 = arith.constant 0 : index
    %35 = vector.load %arg2[%c7, %c0_16, %c0_17] : memref<9x8x256xf32, #tpu.memory_space<vmem>>, vector<1x8x256xf32>
    %36 = vector.shape_cast %35 : vector<1x8x256xf32> to vector<8x256xf32>
    %37 = arith.mulf %34, %36 : vector<8x256xf32>
    %38 = arith.addf %33, %37 : vector<8x256xf32>
    %c239_i32 = arith.constant 239 : i32
    %39 = tpu.dynamic_rotate %0 by %c239_i32 dim 1 : vector<8x256xf32>, i32 -> vector<8x256xf32>
    %c8 = arith.constant 8 : index
    %c0_18 = arith.constant 0 : index
    %c0_19 = arith.constant 0 : index
    %40 = vector.load %arg2[%c8, %c0_18, %c0_19] : memref<9x8x256xf32, #tpu.memory_space<vmem>>, vector<1x8x256xf32>
    %41 = vector.shape_cast %40 : vector<1x8x256xf32> to vector<8x256xf32>
    %42 = arith.mulf %39, %41 : vector<8x256xf32>
    %43 = arith.addf %38, %42 : vector<8x256xf32>
    %c0_20 = arith.constant 0 : index
    %c0_21 = arith.constant 0 : index
    %44 = vector.load %arg3[%c0_20, %c0_21] : memref<16x8xf32, #tpu.memory_space<vmem>>, vector<16x8xf32>
    %45 = arith.truncf %44 : vector<16x8xf32> to vector<16x8xbf16>
    %46 = arith.extf %45 : vector<16x8xbf16> to vector<16x8xf32>
    %47 = arith.subf %44, %46 : vector<16x8xf32>
    %48 = arith.truncf %43 : vector<8x256xf32> to vector<8x256xbf16>
    %49 = arith.extf %48 : vector<8x256xbf16> to vector<8x256xf32>
    %50 = arith.subf %43, %49 : vector<8x256xf32>
    %cst = arith.constant dense<0.000000e+00> : vector<16x256xf32>
    %51 = tpu.matmul %46, %49, %cst {dimension_numbers = #tpu.dot_dimension_numbers<[1], [0], [0], [1], [0, 0, 1, 1], [], []>} : vector<16x8xf32>, vector<8x256xf32>, vector<16x256xf32> -> vector<16x256xf32>
    %cst_22 = arith.constant dense<0.000000e+00> : vector<16x256xf32>
    %52 = tpu.matmul %46, %50, %cst_22 {dimension_numbers = #tpu.dot_dimension_numbers<[1], [0], [0], [1], [0, 0, 1, 1], [], []>} : vector<16x8xf32>, vector<8x256xf32>, vector<16x256xf32> -> vector<16x256xf32>
    %53 = arith.addf %51, %52 : vector<16x256xf32>
    %cst_23 = arith.constant dense<0.000000e+00> : vector<16x256xf32>
    %54 = tpu.matmul %47, %49, %cst_23 {dimension_numbers = #tpu.dot_dimension_numbers<[1], [0], [0], [1], [0, 0, 1, 1], [], []>} : vector<16x8xf32>, vector<8x256xf32>, vector<16x256xf32> -> vector<16x256xf32>
    %55 = arith.addf %53, %54 : vector<16x256xf32>
    %c0_24 = arith.constant 0 : index
    %c0_25 = arith.constant 0 : index
    %56 = vector.load %arg4[%c0_24, %c0_25] : memref<16x1xf32, #tpu.memory_space<vmem>>, vector<16x1xf32>
    %57 = vector.broadcast %56 : vector<16x1xf32> to vector<16x256xf32>
    %58 = arith.addf %55, %57 : vector<16x256xf32>
    %c0_26 = arith.constant 0 : index
    %c0_27 = arith.constant 0 : index
    %59 = vector.load %arg5[%c0_26, %c0_27] : memref<16x256xf32, #tpu.memory_space<vmem>>, vector<16x256xf32>
    tpu.vector_store %arg5[%c0_26, %c0_27], %58 {strides = array<i32>} : memref<16x256xf32, #tpu.memory_space<vmem>>, vector<16x256xf32>,
    return
  }
  func.func @transform_0(%arg0: i32) -> (i32, i32) {
    %c0_i32 = arith.constant 0 : i32
    %c0_i32_0 = arith.constant 0 : i32
    return %arg0, %c0_i32 : i32, i32
  }
  func.func @transform_1(%arg0: i32) -> (i32, i32, i32) {
    %c0_i32 = arith.constant 0 : i32
    %c0_i32_0 = arith.constant 0 : i32
    %c0_i32_1 = arith.constant 0 : i32
    %c0_i32_2 = arith.constant 0 : i32
    return %c0_i32, %c0_i32_0, %c0_i32_1 : i32, i32, i32
  }
  func.func @transform_2(%arg0: i32) -> (i32, i32) {
    %c0_i32 = arith.constant 0 : i32
    %c0_i32_0 = arith.constant 0 : i32
    %c0_i32_1 = arith.constant 0 : i32
    return %c0_i32, %c0_i32_0 : i32, i32
  }
  func.func @transform_3(%arg0: i32) -> (i32, i32) {
    %c0_i32 = arith.constant 0 : i32
    %c0_i32_0 = arith.constant 0 : i32
    %c0_i32_1 = arith.constant 0 : i32
    return %c0_i32, %c0_i32_0 : i32, i32
  }
  func.func @transform_4(%arg0: i32) -> (i32, i32) {
    %c0_i32 = arith.constant 0 : i32
    %c0_i32_0 = arith.constant 0 : i32
    return %arg0, %c0_i32 : i32, i32
  }
}

</mosaic_0001>

<llo_original>
// kernel: tpu_custom_call.1
$region0: #{tpu_custom_call.1}
  #allocation0 [shape = 'u32[]', space=smem, size = 0x4, offset = 0x4, fixed_abs, tag = 'smem constant byte address 0x4 - core index']
  #allocation1 [shape = 'u32[72,128]{1,0:T(1,128)}', space=vmem, size = 0x9000, scoped, tag = 'internal scratch']
  %s0 = inlined_call_operand.vmem [shape: f32[8,256], index: 0, kind: input, shape index: {}]
  %s1 = inlined_call_operand.hbm [shape: f32[9,8,256], index: 1, kind: input, shape index: {}]
  %s2 = inlined_call_operand.vmem [shape: f32[16,8], index: 2, kind: input, shape index: {}]
  %s3 = inlined_call_operand.vmem [shape: f32[16,1], index: 3, kind: input, shape index: {}]
  %s4 = inlined_call_operand.hbm [shape: f32[16,256], index: 4, kind: output, shape index: {}]
  %s5 = sld [smem:[#allocation0]]
  $region30: #{tpu_custom_call.1} parent=0
    _
  %s7 = ssub.s32 1, %s5
  %s8 = scalar_select 0, %s7, %s5
  $region1: #{tpu_custom_call.1} parent=0
    #allocation2 [shape = 'u8[73728]{0}', space=vmem, size = 0x12000, scoped, tag = 'input window, operand 1, single buffered']
    #allocation3 [shape = 's32[1]{0}', space=sflag, size = 0x4, scoped, tag = 'scoped memory for tpu_custom_call.1']
    #allocation4 [shape = 's32[1]{0}', space=sflag, size = 0x4, scoped, tag = 'scoped memory for tpu_custom_call.1']
    #allocation5 [shape = 'u8[16384]{0}', space=vmem, size = 0x4000, scoped, tag = 'output window, operand 0, single buffered']
    %9 = vsyncpa [#allocation3], 0
    %10 = vsyncpa [#allocation4], 0
    // Predicated region
    $region2: #{tpu_custom_call.1} parent=1 // pred_check
      _
    $region3: #{tpu_custom_call.1} parent=1 // pred_check_branch
      %12 = sbr.rel (0) target = $region5
    $region4: #{tpu_custom_call.1} parent=1 // pred_region
      _
    $region5: #{tpu_custom_call.1} parent=1 // pred_fallthru
      _
    // Predicated region
    $region6: #{tpu_custom_call.1} parent=1 // pred_check
      _
    $region7: #{tpu_custom_call.1} parent=1 // pred_check_branch
      %14 = sbr.rel (0) target = $region9
    $region8: #{tpu_custom_call.1} parent=1 // pred_region
      %16 = vsyncadd [#allocation3], 0
      %s17 = sshll.u32 %s1, 4
      %s18 = int_to_ptr.hbm [resolvable:$true] %s17
      %s19 = sshll.u32 [#allocation2], 4
      %s20 = int_to_ptr.vmem [resolvable:$true] %s19
      %25 = dma.hbm_to_vmem [thread:$0]  %s18, 2304, %s20, [#allocation3], 256, 256, 16
    $region9: #{tpu_custom_call.1} parent=1 // pred_fallthru
      _
    // Predicated region
    $region10: #{tpu_custom_call.1} parent=1 // pred_check
      _
    $region11: #{tpu_custom_call.1} parent=1 // pred_check_branch
      %27 = sbr.rel (0) target = $region13
    $region12: #{tpu_custom_call.1} parent=1 // pred_region
      _
    $region13: #{tpu_custom_call.1} parent=1 // pred_fallthru
      _
    // Predicated region
    $region14: #{tpu_custom_call.1} parent=1 // pred_check
      _
    $region15: #{tpu_custom_call.1} parent=1 // pred_check_branch
      %29 = sbr.rel (0) target = $region17
    $region16: #{tpu_custom_call.1} parent=1 // pred_region
      _
    $region17: #{tpu_custom_call.1} parent=1 // pred_fallthru
      _
    // Predicated region
    $region18: #{tpu_custom_call.1} parent=1 // pred_check
      _
    $region19: #{tpu_custom_call.1} parent=1 // pred_check_branch
      %31 = sbr.rel (0) target = $region21
    $region20: #{tpu_custom_call.1} parent=1 // pred_region
      %33 = dma.done [#allocation3], 2304
    $region21: #{tpu_custom_call.1} parent=1 // pred_fallthru
      _
    %v34 = vld [vmem:[%s0] sm:$0xff]
    %v35 = vld [vmem:[%s0 + $0x8] sm:$0xff]
    %36 = vrot.lane.b32.xlu0 %v34, 17
    %v37 = vpop.permute.xlu0 %36
    %38 = vrot.lane.b32.xlu0 %v35, 17
    %v39 = vpop.permute.xlu0 %38
    %v40 = vlaneseq
    %v41 = vand.u32 %v40, 127
    %vm42 = vcmp.lt.s32.totalorder %v41, 17
    %v43 = vsel %vm42, %v37, %v39
    %v44 = vsel %vm42, %v39, %v37
    %v45 = vld [vmem:[#allocation2] sm:$0xff]
    %v46 = vld [vmem:[#allocation2 + $0x8] sm:$0xff]
    %v47 = vmul.f32 %v44, %v45
    %v48 = vmul.f32 %v43, %v46
    %49 = vrot.lane.b32.xlu0 %v34, 16
    %v50 = vpop.permute.xlu0 %49
    %51 = vrot.lane.b32.xlu0 %v35, 16
    %v52 = vpop.permute.xlu0 %51
    %vm53 = vcmp.lt.s32.totalorder %v41, 16
    %v54 = vsel %vm53, %v50, %v52
    %v55 = vsel %vm53, %v52, %v50
    %s56 = scalar_lea.vmem [#allocation2], 16
    %v57 = vld [vmem:[%s56] sm:$0xff]
    %v58 = vld [vmem:[%s56 + $0x8] sm:$0xff]
    %v59 = vmul.f32 %v55, %v57
    %v60 = vmul.f32 %v54, %v58
    %v61 = vadd.f32 %v47, %v59
    %v62 = vadd.f32 %v48, %v60
    %63 = vrot.lane.b32.xlu0 %v34, 15
    %v64 = vpop.permute.xlu0 %63
    %65 = vrot.lane.b32.xlu0 %v35, 15
    %v66 = vpop.permute.xlu0 %65
    %vm67 = vcmp.lt.s32.totalorder %v41, 15
    %v68 = vsel %vm67, %v64, %v66
    %v69 = vsel %vm67, %v66, %v64
    %s70 = scalar_lea.vmem [#allocation2], 32
    %v71 = vld [vmem:[%s70] sm:$0xff]
    %v72 = vld [vmem:[%s70 + $0x8] sm:$0xff]
    %v73 = vmul.f32 %v69, %v71
    %v74 = vmul.f32 %v68, %v72
    %v75 = vadd.f32 %v61, %v73
    %v76 = vadd.f32 %v62, %v74
    %77 = vrot.lane.b32.xlu0 %v34, 1
    %v78 = vpop.permute.xlu0 %77
    %79 = vrot.lane.b32.xlu0 %v35, 1
    %v80 = vpop.permute.xlu0 %79
    %vm81 = vcmp.lt.s32.totalorder %v41, 1
    %v82 = vsel %vm81, %v78, %v80
    %v83 = vsel %vm81, %v80, %v78
    %s84 = scalar_lea.vmem [#allocation2], 48
    %v85 = vld [vmem:[%s84] sm:$0xff]
    %v86 = vld [vmem:[%s84 + $0x8] sm:$0xff]
    %v87 = vmul.f32 %v83, %v85
    %v88 = vmul.f32 %v82, %v86
    %v89 = vadd.f32 %v75, %v87
    %v90 = vadd.f32 %v76, %v88
    %s91 = scalar_lea.vmem [#allocation2], 64
    %v92 = vld [vmem:[%s91] sm:$0xff]
    %v93 = vld [vmem:[%s91 + $0x8] sm:$0xff]
    %v94 = vmul.f32 %v34, %v92
    %v95 = vmul.f32 %v35, %v93
    %v96 = vadd.f32 %v89, %v94
    %v97 = vadd.f32 %v90, %v95
    %98 = vrot.lane.b32.xlu0 %v34, 127
    %v99 = vpop.permute.xlu0 %98
    %100 = vrot.lane.b32.xlu0 %v35, 127
    %v101 = vpop.permute.xlu0 %100
    %vm102 = vcmp.lt.s32.totalorder %v41, 127
    %v103 = vsel %vm102, %v99, %v101
    %v104 = vsel %vm102, %v101, %v99
    %s105 = scalar_lea.vmem [#allocation2], 80
    %v106 = vld [vmem:[%s105] sm:$0xff]
    %v107 = vld [vmem:[%s105 + $0x8] sm:$0xff]
    %v108 = vmul.f32 %v103, %v106
    %v109 = vmul.f32 %v104, %v107
    %v110 = vadd.f32 %v96, %v108
    %v111 = vadd.f32 %v97, %v109
    %112 = vrot.lane.b32.xlu0 %v34, 113
    %v113 = vpop.permute.xlu0 %112
    %114 = vrot.lane.b32.xlu0 %v35, 113
    %v115 = vpop.permute.xlu0 %114
    %vm116 = vcmp.lt.s32.totalorder %v41, 113
    %v117 = vsel %vm116, %v113, %v115
    %v118 = vsel %vm116, %v115, %v113
    %s119 = scalar_lea.vmem [#allocation2], 96
    %v120 = vld [vmem:[%s119] sm:$0xff]
    %v121 = vld [vmem:[%s119 + $0x8] sm:$0xff]
    %v122 = vmul.f32 %v117, %v120
    %v123 = vmul.f32 %v118, %v121
    %v124 = vadd.f32 %v110, %v122
    %v125 = vadd.f32 %v111, %v123
    %126 = vrot.lane.b32.xlu0 %v34, 112
    %v127 = vpop.permute.xlu0 %126
    %128 = vrot.lane.b32.xlu0 %v35, 112
    %v129 = vpop.permute.xlu0 %128
    %vm130 = vcmp.lt.s32.totalorder %v41, 112
    %v131 = vsel %vm130, %v127, %v129
    %v132 = vsel %vm130, %v129, %v127
    %s133 = scalar_lea.vmem [#allocation2], 112
    %v134 = vld [vmem:[%s133] sm:$0xff]
    %v135 = vld [vmem:[%s133 + $0x8] sm:$0xff]
    %v136 = vmul.f32 %v131, %v134
    %v137 = vmul.f32 %v132, %v135
    %v138 = vadd.f32 %v124, %v136
    %v139 = vadd.f32 %v125, %v137
    %140 = vrot.lane.b32.xlu0 %v34, 111
    %v141 = vpop.permute.xlu0 %140
    %142 = vrot.lane.b32.xlu0 %v35, 111
    %v143 = vpop.permute.xlu0 %142
    %vm144 = vcmp.lt.s32.totalorder %v41, 111
    %v145 = vsel %vm144, %v141, %v143
    %v146 = vsel %vm144, %v143, %v141
    %s147 = scalar_lea.vmem [#allocation2], 128
    %v148 = vld [vmem:[%s147] sm:$0xff]
    %v149 = vld [vmem:[%s147 + $0x8] sm:$0xff]
    %v150 = vmul.f32 %v145, %v148
    %v151 = vmul.f32 %v146, %v149
    %v152 = vadd.f32 %v138, %v150
    %v153 = vadd.f32 %v139, %v151
    %v154 = vld [vmem:[%s2] sm:$0xff]
    %v155 = vld [vmem:[%s2 + $0x8] sm:$0xff]
    %v156 = vpack.c.bf16 %v154, %v154
    %v157 = vpack.c.bf16 %v155, %v155
    %v158 = vunpack.c.l.bf16 %v156
    %v159 = vunpack.c.l.bf16 %v157
    %v160 = vsub.f32 %v154, %v158
    %v161 = vsub.f32 %v155, %v159
    %v162 = vpack.c.bf16 %v153, %v152
    %v163 = vunpack.c.l.bf16 %v162
    %v164 = vunpack.c.h.bf16 %v162
    %v165 = vsub.f32 %v152, %v163
    %v166 = vsub.f32 %v153, %v164
    %vm167 = vcmask 64512
    %v169 = vsel %vm167, %v158, 0
    %v172 = vsel %vm167, %v159, 0
    %174 = vmatpush.msra.mxu0 0.0
    %175 = vmatpush.msra.mxu0 0.0
    %176 = vmatpush.msra.mxu0 0.0
    %177 = vmatpush.msra.mxu0 0.0
    %178 = vmatpush.msra.mxu0 0.0
    %179 = vmatpush.msra.mxu0 0.0
    %180 = vmatpush.msra.mxu0 0.0
    %181 = vmatpush.msra.mxu0 0.0
    %182 = vmatpush.msra.mxu0 0.0
    %183 = vmatpush.msra.mxu0 0.0
    %184 = vmatpush.msra.mxu0 0.0
    %185 = vmatpush.msra.mxu0 0.0
    %186 = vmatpush.msra.mxu0 0.0
    %187 = vmatpush.msra.mxu0 0.0
    %188 = vmatpush.msra.mxu0 0.0
    %189 = vmatpush.msra.mxu0 %v165
    %190 = vmatmul.f32.gmra.mxu0 %v169
    %v191 = vpop.f32.mrf.mxu0
    %v192 = vadd.f32 0.0, %v191
    %193 = vmatmul.f32.gmra.mxu0 %v172
    %v194 = vpop.f32.mrf.mxu0
    %v195 = vadd.f32 0.0, %v194
    %196 = vdwg.mxu0
    %197 = vmatpush.msra.mxu0 0.0
    %198 = vmatpush.msra.mxu0 0.0
    %199 = vmatpush.msra.mxu0 0.0
    %200 = vmatpush.msra.mxu0 0.0
    %201 = vmatpush.msra.mxu0 0.0
    %202 = vmatpush.msra.mxu0 0.0
    %203 = vmatpush.msra.mxu0 0.0
    %204 = vmatpush.msra.mxu0 0.0
    %205 = vmatpush.msra.mxu0 0.0
    %206 = vmatpush.msra.mxu0 0.0
    %207 = vmatpush.msra.mxu0 0.0
    %208 = vmatpush.msra.mxu0 0.0
    %209 = vmatpush.msra.mxu0 0.0
    %210 = vmatpush.msra.mxu0 0.0
    %211 = vmatpush.msra.mxu0 0.0
    %212 = vmatpush.msra.mxu0 %v166
    %213 = vmatmul.f32.gmra.mxu0 %v169
    %v214 = vpop.f32.mrf.mxu0
    %v215 = vadd.f32 0.0, %v214
    %216 = vmatmul.f32.gmra.mxu0 %v172
    %v217 = vpop.f32.mrf.mxu0
    %v218 = vadd.f32 0.0, %v217
    %219 = vdwg.mxu0
    %220 = vmatpush.msra.mxu0 0.0
    %221 = vmatpush.msra.mxu0 0.0
    %222 = vmatpush.msra.mxu0 0.0
    %223 = vmatpush.msra.mxu0 0.0
    %224 = vmatpush.msra.mxu0 0.0
    %225 = vmatpush.msra.mxu0 0.0
    %226 = vmatpush.msra.mxu0 0.0
    %227 = vmatpush.msra.mxu0 0.0
    %228 = vmatpush.msra.mxu0 0.0
    %229 = vmatpush.msra.mxu0 0.0
    %230 = vmatpush.msra.mxu0 0.0
    %231 = vmatpush.msra.mxu0 0.0
    %232 = vmatpush.msra.mxu0 0.0
    %233 = vmatpush.msra.mxu0 0.0
    %234 = vmatpush.msra.mxu0 0.0
    %235 = vmatpush.msra.mxu0 %v163
    %236 = vmatmul.f32.gmra.mxu0 %v169
    %v237 = vpop.f32.mrf.mxu0
    %v238 = vadd.f32 %v192, %v237
    %239 = vmatmul.f32.gmra.mxu0 %v172
    %v240 = vpop.f32.mrf.mxu0
    %v241 = vadd.f32 %v195, %v240
    %242 = vdwg.mxu0
    %243 = vmatpush.msra.mxu0 0.0
    %244 = vmatpush.msra.mxu0 0.0
    %245 = vmatpush.msra.mxu0 0.0
    %246 = vmatpush.msra.mxu0 0.0
    %247 = vmatpush.msra.mxu0 0.0
    %248 = vmatpush.msra.mxu0 0.0
    %249 = vmatpush.msra.mxu0 0.0
    %250 = vmatpush.msra.mxu0 0.0
    %251 = vmatpush.msra.mxu0 0.0
    %252 = vmatpush.msra.mxu0 0.0
    %253 = vmatpush.msra.mxu0 0.0
    %254 = vmatpush.msra.mxu0 0.0
    %255 = vmatpush.msra.mxu0 0.0
    %256 = vmatpush.msra.mxu0 0.0
    %257 = vmatpush.msra.mxu0 0.0
    %258 = vmatpush.msra.mxu0 %v164
    %259 = vmatmul.f32.gmra.mxu0 %v169
    %v260 = vpop.f32.mrf.mxu0
    %v261 = vadd.f32 %v215, %v260
    %262 = vmatmul.f32.gmra.mxu0 %v172
    %v263 = vpop.f32.mrf.mxu0
    %v264 = vadd.f32 %v218, %v263
    %265 = vdwg.mxu0
    %v267 = vsel %vm167, %v160, 0
    %v270 = vsel %vm167, %v161, 0
    %272 = vmatpush.msra.mxu0 0.0
    %273 = vmatpush.msra.mxu0 0.0
    %274 = vmatpush.msra.mxu0 0.0
    %275 = vmatpush.msra.mxu0 0.0
    %276 = vmatpush.msra.mxu0 0.0
    %277 = vmatpush.msra.mxu0 0.0
    %278 = vmatpush.msra.mxu0 0.0
    %279 = vmatpush.msra.mxu0 0.0
    %280 = vmatpush.msra.mxu0 0.0
    %281 = vmatpush.msra.mxu0 0.0
    %282 = vmatpush.msra.mxu0 0.0
    %283 = vmatpush.msra.mxu0 0.0
    %284 = vmatpush.msra.mxu0 0.0
    %285 = vmatpush.msra.mxu0 0.0
    %286 = vmatpush.msra.mxu0 0.0
    %287 = vmatpush.msra.mxu0 %v163
    %288 = vmatmul.f32.gmra.mxu0 %v267
    %v289 = vpop.f32.mrf.mxu0
    %v290 = vadd.f32 0.0, %v289
    %291 = vmatmul.f32.gmra.mxu0 %v270
    %v292 = vpop.f32.mrf.mxu0
    %v293 = vadd.f32 0.0, %v292
    %294 = vdwg.mxu0
    %295 = vmatpush.msra.mxu0 0.0
    %296 = vmatpush.msra.mxu0 0.0
    %297 = vmatpush.msra.mxu0 0.0
    %298 = vmatpush.msra.mxu0 0.0
    %299 = vmatpush.msra.mxu0 0.0
    %300 = vmatpush.msra.mxu0 0.0
    %301 = vmatpush.msra.mxu0 0.0
    %302 = vmatpush.msra.mxu0 0.0
    %303 = vmatpush.msra.mxu0 0.0
    %304 = vmatpush.msra.mxu0 0.0
    %305 = vmatpush.msra.mxu0 0.0
    %306 = vmatpush.msra.mxu0 0.0
    %307 = vmatpush.msra.mxu0 0.0
    %308 = vmatpush.msra.mxu0 0.0
    %309 = vmatpush.msra.mxu0 0.0
    %310 = vmatpush.msra.mxu0 %v164
    %311 = vmatmul.f32.gmra.mxu0 %v267
    %v312 = vpop.f32.mrf.mxu0
    %v313 = vadd.f32 0.0, %v312
    %314 = vmatmul.f32.gmra.mxu0 %v270
    %v315 = vpop.f32.mrf.mxu0
    %v316 = vadd.f32 0.0, %v315
    %317 = vdwg.mxu0
    %v318 = vadd.f32 %v238, %v290
    %v319 = vadd.f32 %v261, %v313
    %v320 = vadd.f32 %v241, %v293
    %v321 = vadd.f32 %v264, %v316
    %v322 = vld [vmem:[%s3] sm:$0xff]
    %v323 = vld [vmem:[%s3 + $0x8] sm:$0xff]
    %325 = vset.pattern.permute.xlu0 0
    %326 = vperm.xlu0 %325, %v322
    %v327 = vpop.permute.xlu0 %326
    %330 = vset.pattern.permute.xlu0 0
    %331 = vperm.xlu0 %330, %v323
    %v332 = vpop.permute.xlu0 %331
    %v334 = vadd.f32 %v318, %v327
    %v335 = vadd.f32 %v319, %v327
    %v336 = vadd.f32 %v320, %v332
    %v337 = vadd.f32 %v321, %v332
    %338 = vst [vmem:[#allocation5] sm:$0xff] %v334
    %339 = vst [vmem:[#allocation5 + $0x8] sm:$0xff] %v335
    %340 = vst [vmem:[#allocation5 + $0x10] sm:$0xff] %v336
    %341 = vst [vmem:[#allocation5 + $0x18] sm:$0xff] %v337
    // Predicated region
    $region22: #{tpu_custom_call.1} parent=1 // pred_check
      _
    $region23: #{tpu_custom_call.1} parent=1 // pred_check_branch
      %343 = sbr.rel (0) target = $region25
    $region24: #{tpu_custom_call.1} parent=1 // pred_region
      %345 = vsyncadd [#allocation4], 0
      %s346 = sshll.u32 [#allocation5], 4
      %s347 = int_to_ptr.vmem [resolvable:$true] %s346
      %s348 = sshll.u32 %s4, 4
      %s349 = int_to_ptr.hbm [resolvable:$true] %s348
      %354 = dma.vmem_to_hbm [thread:$0]  %s347, 512, %s349, [#allocation4], 256, 256, 16
    $region25: #{tpu_custom_call.1} parent=1 // pred_fallthru
      _
    // Predicated region
    $region26: #{tpu_custom_call.1} parent=1 // pred_check
      _
    $region27: #{tpu_custom_call.1} parent=1 // pred_check_branch
      %356 = sbr.rel (0) target = $region29
    $region28: #{tpu_custom_call.1} parent=1 // pred_region
      %358 = dma.done [#allocation4], 512
    $region29: #{tpu_custom_call.1} parent=1 // pred_fallthru
      _
    %359 = vsyncpa [#allocation3], 1
    %360 = vsyncpa [#allocation4], 1

</llo_original>
